<compile_context>
chip_gen: v7x
topology: tpu7x:2x2x1
jax: 0.10.0
libtpu: 0.0.40
codegen_flags: <defaults>
</compile_context>

<pallas_src>
import numpy as np
import jax
import jax.numpy as jnp
from jax.experimental import pallas as pl
from jax.experimental.pallas import tpu as pltpu

LANE = 128


def _round_up(n, m):
    return (n + m - 1) // m * m


def _cdiv(a, b):
    return -(-a // b)


def _head_kernel(x_ref, w1_ref, b1_ref, w2_ref, b2_ref, o_ref):
    # Cast the streamed x tile in-kernel (no separate XLA astype pass in HBM).
    x = x_ref[...].astype(w1_ref.dtype)
    # dense: (TILE_R, 2H) @ (2H, H) on the MXU, f32 accumulation.
    h = jnp.dot(x, w1_ref[...], preferred_element_type=jnp.float32)
    # bias add (VPU) + tanh (EUP) in f32 — off the critical MXU slot.
    h = jnp.tanh(h + b1_ref[...])
    # out_proj: (TILE_R, H) @ (H, 128) lane-dense; operands in compute_dtype
    # (single-pass bf16 MXU by default), f32 accumulation.
    out = jnp.dot(h.astype(w2_ref.dtype), w2_ref[...],
                  preferred_element_type=jnp.float32)
    o_ref[...] = (out + b2_ref[...]).astype(o_ref.dtype)


def roberta_classification_head(x, w_dense, b_dense, w_out, b_out,
                                *, tile_r=1024, compute_dtype=jnp.bfloat16):
    """x: [..., 2, H] (any leading dims); returns [R, n_cls], R = x.size/(2H).

    Weights are stored (in_features, out_features), so the kernel computes
    x @ W + b (equivalent to PyTorch's x @ W.T with its (out, in) layout).
    """
    hidden2, hidden = w_dense.shape          # (2H, H)
    n_cls = w_out.shape[1]
    out_dtype = x.dtype

    x2d = x.reshape(-1, hidden2)             # glue reshape only: no cast, no pad
    rows = x2d.shape[0]

    # Row tile: multiple of the sublane pack for x's dtype, capped at tile_r.
    sublane = max(8, 32 // np.dtype(x2d.dtype).itemsize)
    tr = max(sublane, min(_round_up(tile_r, sublane), _round_up(rows, sublane)))
    n_tiles = _cdiv(rows, tr)
    # Megacore (v7x): ensure >= 2 row tiles when possible so both TCs get work.
    if n_tiles == 1 and rows > sublane:
        tr = _round_up(_cdiv(rows, 2), sublane)
        n_tiles = _cdiv(rows, tr)

    # Resident operands: weight streams in compute_dtype (bf16 by default),
    # biases stay f32 (added to the f32 accumulator).
    w1 = w_dense.astype(compute_dtype)
    b1 = b_dense.astype(jnp.float32).reshape(1, hidden)

    # Lane-dense output path: zero-pad out_proj to 128 columns.
    n_out = _round_up(max(n_cls, 1), LANE)
    w2 = jnp.pad(w_out.astype(compute_dtype), ((0, 0), (0, n_out - n_cls)))
    b2 = jnp.pad(b_out.astype(jnp.float32).reshape(1, n_cls),
                 ((0, 0), (0, n_out - n_cls)))

    cd_size = np.dtype(compute_dtype).itemsize
    x_size = np.dtype(x2d.dtype).itemsize
    out_size = np.dtype(out_dtype).itemsize

    # VMEM budget: x tile double-buffered, resident weights single-buffered,
    # f32/bf16 intermediates, padded output double-buffered.  1.5x headroom,
    # capped at the v7x per-TC physical ceiling (64 MiB).
    vmem_est = (2 * tr * hidden2 * x_size            # x tile (double-buffered)
                + hidden2 * hidden * cd_size          # w1 (single-buffered)
                + hidden * n_out * cd_size            # w2
                + (hidden + n_out) * 4                # biases
                + tr * hidden2 * cd_size              # in-kernel x cast
                + tr * hidden * (4 + cd_size)         # h f32 + h cast
                + tr * n_out * (4 + 2 * out_size))    # out f32 + out tile x2
    vmem_limit = int(min(64 << 20, max(int(1.5 * vmem_est) + (2 << 20), 16 << 20)))

    cost = pl.CostEstimate(
        flops=2 * rows * hidden2 * hidden + 2 * rows * hidden * n_out,
        transcendentals=rows * hidden,
        bytes_accessed=(rows * hidden2 * x_size
                        + hidden2 * hidden * cd_size
                        + hidden * n_out * cd_size
                        + (hidden + n_out) * 4
                        + rows * n_out * out_size))

    resident = pl.Buffered(1)   # constant index_map -> never re-fetched

    out_padded = pl.pallas_call(
        _head_kernel,
        out_shape=jax.ShapeDtypeStruct((rows, n_out), out_dtype),
        grid=(n_tiles,),
        in_specs=[
            pl.BlockSpec((tr, hidden2), lambda i: (i, 0)),           # x row tile
            pl.BlockSpec((hidden2, hidden), lambda i: (0, 0),
                         pipeline_mode=resident),                    # w_dense
            pl.BlockSpec((1, hidden), lambda i: (0, 0),
                         pipeline_mode=resident),                    # b_dense
            pl.BlockSpec((hidden, n_out), lambda i: (0, 0),
                         pipeline_mode=resident),                    # w_out (padded)
            pl.BlockSpec((1, n_out), lambda i: (0, 0),
                         pipeline_mode=resident),                    # b_out (padded)
        ],
        out_specs=pl.BlockSpec((tr, n_out), lambda i: (i, 0)),
        compiler_params=pltpu.CompilerParams(
            dimension_semantics=("parallel",),
            vmem_limit_bytes=vmem_limit),
        cost_estimate=cost,
    )(x2d, w1, b1, w2, b2)

    return out_padded[:rows, :n_cls]


if __name__ == "__main__":
    key = jax.random.PRNGKey(0)
    k_x, k_w1, k_b1, k_w2, k_b2 = jax.random.split(key, 5)

    B, H = 8, 32            # small shapes: batch=8, hidden=32
    x = jax.random.normal(k_x, (B, 2, H), dtype=jnp.float32)

    # nn.Linear shapes from __init__: dense (2H -> H), out_proj (H -> 2),
    # stored here as (in, out).
    w_dense = jax.random.normal(k_w1, (2 * H, H), dtype=jnp.float32) * 0.02
    b_dense = jax.random.normal(k_b1, (H,), dtype=jnp.float32) * 0.02
    w_out = jax.random.normal(k_w2, (H, 2), dtype=jnp.float32) * 0.02
    b_out = jax.random.normal(k_b2, (2,), dtype=jnp.float32) * 0.02

    x2d = x.reshape(-1, 2 * H)
    hi = jax.lax.Precision.HIGHEST

    # Pure-f32 reference (explicit high precision so the reference itself
    # doesn't get silently downcast by XLA's default matmul precision).
    ref_h = jnp.tanh(jnp.dot(x2d, w_dense, precision=hi) + b_dense)
    ref_f32 = jnp.dot(ref_h, w_out, precision=hi) + b_out

    # 1) f32 compute path: must match the pure-f32 reference tightly.
    out_f32 = roberta_classification_head(
        x, w_dense, b_dense, w_out, b_out, compute_dtype=jnp.float32)
    out_f32 = jax.block_until_ready(out_f32)
    assert out_f32.shape == (B, 2), out_f32.shape
    assert jnp.allclose(out_f32, ref_f32, atol=2e-5), "f32 mismatch vs reference"

    # 2) Default bf16 path: both matmuls run with bf16 operands + f32 accum.
    #    Compare against a bf16-matched reference and (loosely) against f32.
    out_bf16 = roberta_classification_head(x, w_dense, b_dense, w_out, b_out)
    out_bf16 = jax.block_until_ready(out_bf16)
    x_bf = x2d.astype(jnp.bfloat16).astype(jnp.float32)
    w1_bf = w_dense.astype(jnp.bfloat16).astype(jnp.float32)
    h_bf = jnp.tanh(jnp.dot(x_bf, w1_bf, precision=hi) + b_dense)
    h_bf = h_bf.astype(jnp.bfloat16).astype(jnp.float32)
    w2_bf = w_out.astype(jnp.bfloat16).astype(jnp.float32)
    ref_bf16 = jnp.dot(h_bf, w2_bf, precision=hi) + b_out
    assert out_bf16.shape == (B, 2), out_bf16.shape
    assert jnp.allclose(out_bf16, ref_bf16, atol=2e-3), "bf16 mismatch vs reference"
    assert jnp.allclose(out_bf16, ref_f32, atol=1e-2), "bf16 drifted from f32 reference"

    print("KERNEL_OK")
</pallas_src>

<mosaic_0001>
module attributes {stable_mosaic.version = 11 : i64} {
  func.func @_head_kernel(%arg0: i32, %arg1: memref<8x64xf32, #tpu.memory_space<vmem>>, %arg2: memref<64x32xf32, #tpu.memory_space<vmem>>, %arg3: memref<1x32xf32, #tpu.memory_space<vmem>>, %arg4: memref<32x128xf32, #tpu.memory_space<vmem>>, %arg5: memref<1x128xf32, #tpu.memory_space<vmem>>, %arg6: memref<8x128xf32, #tpu.memory_space<vmem>>) attributes {dimension_semantics = [#tpu.dimension_semantics<parallel>], iteration_bounds = array<i64: 1>, scalar_prefetch = 0 : i64, scratch_operands = 0 : i64, tpu.core_type = #tpu.core_type<tc>, window_params = [{transform_indices = @transform_0, window_bounds = array<i64: 8, 64>}, {pipeline_mode = #tpu.pipeline_mode<synchronous>, transform_indices = @transform_1, window_bounds = array<i64: 64, 32>}, {pipeline_mode = #tpu.pipeline_mode<synchronous>, transform_indices = @transform_2, window_bounds = array<i64: 1, 32>}, {pipeline_mode = #tpu.pipeline_mode<synchronous>, transform_indices = @transform_3, window_bounds = array<i64: 32, 128>}, {pipeline_mode = #tpu.pipeline_mode<synchronous>, transform_indices = @transform_4, window_bounds = array<i64: 1, 128>}, {transform_indices = @transform_5, window_bounds = array<i64: 8, 128>}]} {
    %c0 = arith.constant 0 : index
    %c0_0 = arith.constant 0 : index
    %0 = vector.load %arg1[%c0, %c0_0] : memref<8x64xf32, #tpu.memory_space<vmem>>, vector<8x64xf32>
    %c0_1 = arith.constant 0 : index
    %c0_2 = arith.constant 0 : index
    %1 = vector.load %arg2[%c0_1, %c0_2] : memref<64x32xf32, #tpu.memory_space<vmem>>, vector<64x32xf32>
    %cst = arith.constant dense<0.000000e+00> : vector<8x32xf32>
    %2 = tpu.matmul %0, %1, %cst {dimension_numbers = #tpu.dot_dimension_numbers<[1], [0], [0], [1], [0, 0, 1, 1], [], []>} : vector<8x64xf32>, vector<64x32xf32>, vector<8x32xf32> -> vector<8x32xf32>
    %c0_3 = arith.constant 0 : index
    %c0_4 = arith.constant 0 : index
    %3 = vector.load %arg3[%c0_3, %c0_4] : memref<1x32xf32, #tpu.memory_space<vmem>>, vector<1x32xf32>
    %4 = vector.broadcast %3 : vector<1x32xf32> to vector<8x32xf32>
    %5 = arith.addf %2, %4 : vector<8x32xf32>
    %6 = math.tanh %5 : vector<8x32xf32>
    %c0_5 = arith.constant 0 : index
    %c0_6 = arith.constant 0 : index
    %7 = vector.load %arg4[%c0_5, %c0_6] : memref<32x128xf32, #tpu.memory_space<vmem>>, vector<32x128xf32>
    %cst_7 = arith.constant dense<0.000000e+00> : vector<8x128xf32>
    %8 = tpu.matmul %6, %7, %cst_7 {dimension_numbers = #tpu.dot_dimension_numbers<[1], [0], [0], [1], [0, 0, 1, 1], [], []>} : vector<8x32xf32>, vector<32x128xf32>, vector<8x128xf32> -> vector<8x128xf32>
    %c0_8 = arith.constant 0 : index
    %c0_9 = arith.constant 0 : index
    %9 = vector.load %arg5[%c0_8, %c0_9] : memref<1x128xf32, #tpu.memory_space<vmem>>, vector<1x128xf32>
    %10 = vector.broadcast %9 : vector<1x128xf32> to vector<8x128xf32>
    %11 = arith.addf %8, %10 : vector<8x128xf32>
    %c0_10 = arith.constant 0 : index
    %c0_11 = arith.constant 0 : index
    %12 = vector.load %arg6[%c0_10, %c0_11] : memref<8x128xf32, #tpu.memory_space<vmem>>, vector<8x128xf32>
    tpu.vector_store %arg6[%c0_10, %c0_11], %11 {strides = array<i32>} : memref<8x128xf32, #tpu.memory_space<vmem>>, vector<8x128xf32>,
    return
  }
  func.func @transform_0(%arg0: i32) -> (i32, i32) {
    %c0_i32 = arith.constant 0 : i32
    %c0_i32_0 = arith.constant 0 : i32
    return %arg0, %c0_i32 : i32, i32
  }
  func.func @transform_1(%arg0: i32) -> (i32, i32) {
    %c0_i32 = arith.constant 0 : i32
    %c0_i32_0 = arith.constant 0 : i32
    %c0_i32_1 = arith.constant 0 : i32
    return %c0_i32, %c0_i32_0 : i32, i32
  }
  func.func @transform_2(%arg0: i32) -> (i32, i32) {
    %c0_i32 = arith.constant 0 : i32
    %c0_i32_0 = arith.constant 0 : i32
    %c0_i32_1 = arith.constant 0 : i32
    return %c0_i32, %c0_i32_0 : i32, i32
  }
  func.func @transform_3(%arg0: i32) -> (i32, i32) {
    %c0_i32 = arith.constant 0 : i32
    %c0_i32_0 = arith.constant 0 : i32
    %c0_i32_1 = arith.constant 0 : i32
    return %c0_i32, %c0_i32_0 : i32, i32
  }
  func.func @transform_4(%arg0: i32) -> (i32, i32) {
    %c0_i32 = arith.constant 0 : i32
    %c0_i32_0 = arith.constant 0 : i32
    %c0_i32_1 = arith.constant 0 : i32
    return %c0_i32, %c0_i32_0 : i32, i32
  }
  func.func @transform_5(%arg0: i32) -> (i32, i32) {
    %c0_i32 = arith.constant 0 : i32
    %c0_i32_0 = arith.constant 0 : i32
    return %arg0, %c0_i32 : i32, i32
  }
}

</mosaic_0001>

<llo_original>
// kernel: tpu_custom_call.1
$region0: #{tpu_custom_call.1}
  #allocation0 [shape = 'u32[]', space=smem, size = 0x4, offset = 0x4, fixed_abs, tag = 'smem constant byte address 0x4 - core index']
  #allocation1 [shape = 'u32[144,128]{1,0:T(1,128)}', space=vmem, size = 0x12000, scoped, tag = 'internal scratch']
  %s0 = inlined_call_operand.vmem [shape: f32[8,64], index: 0, kind: input, shape index: {}]
  %s1 = inlined_call_operand.vmem [shape: f32[64,32], index: 1, kind: input, shape index: {}]
  %s2 = inlined_call_operand.vmem [shape: f32[1,32], index: 2, kind: input, shape index: {}]
  %s3 = inlined_call_operand.vmem [shape: f32[32,128], index: 3, kind: input, shape index: {}]
  %s4 = inlined_call_operand.vmem [shape: f32[1,128], index: 4, kind: input, shape index: {}]
  %s5 = inlined_call_operand.hbm [shape: f32[8,128], index: 5, kind: output, shape index: {}]
  %s6 = sld [smem:[#allocation0]]
  $region30: #{tpu_custom_call.1} parent=0
    _
  %s8 = ssub.s32 1, %s6
  %s9 = scalar_select 0, %s8, %s6
  $region1: #{tpu_custom_call.1} parent=0
    #allocation2 [shape = 'u8[4096]{0}', space=vmem, size = 0x1000, scoped, tag = 'output window, operand 0, single buffered']
    #allocation3 [shape = 's32[1]{0}', space=sflag, size = 0x4, scoped, tag = 'scoped memory for tpu_custom_call.1']
    %10 = vsyncpa [#allocation3], 0
    // Predicated region
    $region2: #{tpu_custom_call.1} parent=1 // pred_check
      _
    $region3: #{tpu_custom_call.1} parent=1 // pred_check_branch
      %12 = sbr.rel (0) target = $region5
    $region4: #{tpu_custom_call.1} parent=1 // pred_region
      _
    $region5: #{tpu_custom_call.1} parent=1 // pred_fallthru
      _
    // Predicated region
    $region6: #{tpu_custom_call.1} parent=1 // pred_check
      _
    $region7: #{tpu_custom_call.1} parent=1 // pred_check_branch
      %14 = sbr.rel (0) target = $region9
    $region8: #{tpu_custom_call.1} parent=1 // pred_region
      _
    $region9: #{tpu_custom_call.1} parent=1 // pred_fallthru
      _
    // Predicated region
    $region10: #{tpu_custom_call.1} parent=1 // pred_check
      _
    $region11: #{tpu_custom_call.1} parent=1 // pred_check_branch
      %16 = sbr.rel (0) target = $region13
    $region12: #{tpu_custom_call.1} parent=1 // pred_region
      _
    $region13: #{tpu_custom_call.1} parent=1 // pred_fallthru
      _
    // Predicated region
    $region14: #{tpu_custom_call.1} parent=1 // pred_check
      _
    $region15: #{tpu_custom_call.1} parent=1 // pred_check_branch
      %18 = sbr.rel (0) target = $region17
    $region16: #{tpu_custom_call.1} parent=1 // pred_region
      _
    $region17: #{tpu_custom_call.1} parent=1 // pred_fallthru
      _
    // Predicated region
    $region18: #{tpu_custom_call.1} parent=1 // pred_check
      _
    $region19: #{tpu_custom_call.1} parent=1 // pred_check_branch
      %20 = sbr.rel (0) target = $region21
    $region20: #{tpu_custom_call.1} parent=1 // pred_region
      _
    $region21: #{tpu_custom_call.1} parent=1 // pred_fallthru
      _
    %v21 = vld [vmem:[%s0] sm:$0xff]
    %v22 = vld [vmem:[%s1] sm:$0xff]
    %v23 = vld [vmem:[%s1 + $0x8] sm:$0xff]
    %v24 = vld [vmem:[%s1 + $0x10] sm:$0xff]
    %v25 = vld [vmem:[%s1 + $0x18] sm:$0xff]
    %v26 = vld [vmem:[%s1 + $0x20] sm:$0xff]
    %v27 = vld [vmem:[%s1 + $0x28] sm:$0xff]
    %v28 = vld [vmem:[%s1 + $0x30] sm:$0xff]
    %v29 = vld [vmem:[%s1 + $0x38] sm:$0xff]
    %v30 = vld [vmem:[%s2] sm:$0x1]
    %v32 = vlaneseq
    %v33 = vshrl.u32 %v32, 7
    %v34 = vsub.s32 0, %v33
    %v35 = vrot.slane %v30, %v34
    %vm37 = vcmask 523264
    %v39 = vsel %vm37, %v21, 0
    %41 = vmatprep.subr.mxu0 0.0
    %42 = vmatpush1.msra.mxu0 %v22
    %43 = vmatprep.subr.mxu0 0.0
    %44 = vmatpush1.msra.mxu0 %v23
    %45 = vmatprep.subr.mxu0 0.0
    %46 = vmatpush1.msra.mxu0 %v24
    %47 = vmatprep.subr.mxu0 0.0
    %48 = vmatpush1.msra.mxu0 %v25
    %49 = vmatprep.subr.mxu0 0.0
    %50 = vmatpush1.msra.mxu0 %v26
    %51 = vmatprep.subr.mxu0 0.0
    %52 = vmatpush1.msra.mxu0 %v27
    %53 = vmatprep.subr.mxu0 0.0
    %54 = vmatpush1.msra.mxu0 %v28
    %55 = vmatprep.subr.mxu0 0.0
    %56 = vmatpush1.msra.mxu0 %v29
    %57 = vmatprep.subr.mxu0 0.0
    %58 = vmatpush1.msra.mxu0 0.0
    %59 = vmatprep.subr.mxu0 0.0
    %60 = vmatpush1.msra.mxu0 0.0
    %61 = vmatprep.subr.mxu0 0.0
    %62 = vmatpush1.msra.mxu0 0.0
    %63 = vmatprep.subr.mxu0 0.0
    %64 = vmatpush1.msra.mxu0 0.0
    %65 = vmatprep.subr.mxu0 0.0
    %66 = vmatpush1.msra.mxu0 0.0
    %67 = vmatprep.subr.mxu0 0.0
    %68 = vmatpush1.msra.mxu0 0.0
    %69 = vmatprep.subr.mxu0 0.0
    %70 = vmatpush1.msra.mxu0 0.0
    %71 = vmatprep.subr.mxu0 0.0
    %72 = vmatpush1.msra.mxu0 0.0
    %73 = vmatprep.subr.mxu0 0.0
    %74 = vmatpush1.msra.mxu0 0.0
    %75 = vmatprep.subr.mxu0 0.0
    %76 = vmatpush1.msra.mxu0 0.0
    %77 = vmatprep.subr.mxu0 0.0
    %78 = vmatpush1.msra.mxu0 0.0
    %79 = vmatprep.subr.mxu0 0.0
    %80 = vmatpush1.msra.mxu0 0.0
    %81 = vmatprep.subr.mxu0 0.0
    %82 = vmatpush1.msra.mxu0 0.0
    %83 = vmatprep.subr.mxu0 0.0
    %84 = vmatpush1.msra.mxu0 0.0
    %85 = vmatprep.subr.mxu0 0.0
    %86 = vmatpush1.msra.mxu0 0.0
    %87 = vmatprep.subr.mxu0 0.0
    %88 = vmatpush1.msra.mxu0 0.0
    %89 = vmatprep.subr.mxu0 0.0
    %90 = vmatpush1.msra.mxu0 0.0
    %91 = vmatprep.subr.mxu0 0.0
    %92 = vmatpush1.msra.mxu0 0.0
    %93 = vmatprep.subr.mxu0 0.0
    %94 = vmatpush1.msra.mxu0 0.0
    %95 = vmatprep.subr.mxu0 0.0
    %96 = vmatpush1.msra.mxu0 0.0
    %97 = vmatprep.subr.mxu0 0.0
    %98 = vmatpush1.msra.mxu0 0.0
    %99 = vmatprep.subr.mxu0 0.0
    %100 = vmatpush1.msra.mxu0 0.0
    %101 = vmatprep.subr.mxu0 0.0
    %102 = vmatpush1.msra.mxu0 0.0
    %103 = vmatprep.subr.mxu0 0.0
    %104 = vmatpush1.msra.mxu0 0.0
    %105 = vmatprep.mubr.f32.mxu0 0.0
    %106 = vmatmul.mubr.f32.gmra.mrb[0].mxu0 %v39
    %v107 = vpop.f32.mrb[0].mxu0
    %v108 = vadd.f32 %v35, %v107
    %v109 = vpop.f32.mrb[0].mxu0
    %110 = vdwg.mxu0
    %v111 = vtanh.pop %v108
    %v112 = vld [vmem:[%s3] sm:$0xff]
    %v113 = vld [vmem:[%s3 + $0x8] sm:$0xff]
    %v114 = vld [vmem:[%s3 + $0x10] sm:$0xff]
    %v115 = vld [vmem:[%s3 + $0x18] sm:$0xff]
    %v116 = vld [vmem:[%s4] sm:$0x1]
    %v118 = vlaneseq
    %v119 = vshrl.u32 %v118, 7
    %v120 = vsub.s32 0, %v119
    %v121 = vrot.slane %v116, %v120
    %vm123 = vcmask 261120
    %v125 = vsel %vm123, %v111, 0
    %127 = vmatprep.subr.mxu0 0.0
    %128 = vmatpush1.msra.mxu0 %v112
    %129 = vmatprep.subr.mxu0 0.0
    %130 = vmatpush1.msra.mxu0 %v113
    %131 = vmatprep.subr.mxu0 0.0
    %132 = vmatpush1.msra.mxu0 %v114
    %133 = vmatprep.subr.mxu0 0.0
    %134 = vmatpush1.msra.mxu0 %v115
    %135 = vmatprep.subr.mxu0 0.0
    %136 = vmatpush1.msra.mxu0 0.0
    %137 = vmatprep.subr.mxu0 0.0
    %138 = vmatpush1.msra.mxu0 0.0
    %139 = vmatprep.subr.mxu0 0.0
    %140 = vmatpush1.msra.mxu0 0.0
    %141 = vmatprep.subr.mxu0 0.0
    %142 = vmatpush1.msra.mxu0 0.0
    %143 = vmatprep.subr.mxu0 0.0
    %144 = vmatpush1.msra.mxu0 0.0
    %145 = vmatprep.subr.mxu0 0.0
    %146 = vmatpush1.msra.mxu0 0.0
    %147 = vmatprep.subr.mxu0 0.0
    %148 = vmatpush1.msra.mxu0 0.0
    %149 = vmatprep.subr.mxu0 0.0
    %150 = vmatpush1.msra.mxu0 0.0
    %151 = vmatprep.subr.mxu0 0.0
    %152 = vmatpush1.msra.mxu0 0.0
    %153 = vmatprep.subr.mxu0 0.0
    %154 = vmatpush1.msra.mxu0 0.0
    %155 = vmatprep.subr.mxu0 0.0
    %156 = vmatpush1.msra.mxu0 0.0
    %157 = vmatprep.subr.mxu0 0.0
    %158 = vmatpush1.msra.mxu0 0.0
    %159 = vmatprep.subr.mxu0 0.0
    %160 = vmatpush1.msra.mxu0 0.0
    %161 = vmatprep.subr.mxu0 0.0
    %162 = vmatpush1.msra.mxu0 0.0
    %163 = vmatprep.subr.mxu0 0.0
    %164 = vmatpush1.msra.mxu0 0.0
    %165 = vmatprep.subr.mxu0 0.0
    %166 = vmatpush1.msra.mxu0 0.0
    %167 = vmatprep.subr.mxu0 0.0
    %168 = vmatpush1.msra.mxu0 0.0
    %169 = vmatprep.subr.mxu0 0.0
    %170 = vmatpush1.msra.mxu0 0.0
    %171 = vmatprep.subr.mxu0 0.0
    %172 = vmatpush1.msra.mxu0 0.0
    %173 = vmatprep.subr.mxu0 0.0
    %174 = vmatpush1.msra.mxu0 0.0
    %175 = vmatprep.subr.mxu0 0.0
    %176 = vmatpush1.msra.mxu0 0.0
    %177 = vmatprep.subr.mxu0 0.0
    %178 = vmatpush1.msra.mxu0 0.0
    %179 = vmatprep.subr.mxu0 0.0
    %180 = vmatpush1.msra.mxu0 0.0
    %181 = vmatprep.subr.mxu0 0.0
    %182 = vmatpush1.msra.mxu0 0.0
    %183 = vmatprep.subr.mxu0 0.0
    %184 = vmatpush1.msra.mxu0 0.0
    %185 = vmatprep.subr.mxu0 0.0
    %186 = vmatpush1.msra.mxu0 0.0
    %187 = vmatprep.subr.mxu0 0.0
    %188 = vmatpush1.msra.mxu0 0.0
    %189 = vmatprep.subr.mxu0 0.0
    %190 = vmatpush1.msra.mxu0 0.0
    %191 = vmatprep.mubr.f32.mxu0 0.0
    %192 = vmatmul.mubr.f32.gmra.mrb[0].mxu0 %v125
    %v193 = vpop.f32.mrb[0].mxu0
    %v194 = vadd.f32 %v121, %v193
    %v195 = vpop.f32.mrb[0].mxu0
    %196 = vdwg.mxu0
    %197 = vst [vmem:[#allocation2] sm:$0xff] %v194
    // Predicated region
    $region22: #{tpu_custom_call.1} parent=1 // pred_check
      _
    $region23: #{tpu_custom_call.1} parent=1 // pred_check_branch
      %199 = sbr.rel (0) target = $region25
    $region24: #{tpu_custom_call.1} parent=1 // pred_region
      %s201 = ssub.s32 128, 128
      %202 = vsyncadd [#allocation3], %s201
      %s204 = sshll.u32 [#allocation2], 4
      %s205 = int_to_ptr.vmem [resolvable:$true] %s204
      %207 = dma.vmem_to_hbm [thread:$0]  %s205, 128, %s5, [#allocation3]
    $region25: #{tpu_custom_call.1} parent=1 // pred_fallthru
      _
    // Predicated region
    $region26: #{tpu_custom_call.1} parent=1 // pred_check
      _
    $region27: #{tpu_custom_call.1} parent=1 // pred_check_branch
      %209 = sbr.rel (0) target = $region29
    $region28: #{tpu_custom_call.1} parent=1 // pred_region
      %210 = dma.done [#allocation3], 128
    $region29: #{tpu_custom_call.1} parent=1 // pred_fallthru
      _
    %211 = vsyncpa [#allocation3], 1

</llo_original>
